<compile_context>
chip_gen: v6e
topology: v6e:2x2x1
jax: 0.10.0
libtpu: 0.0.40
codegen_flags: <defaults>
</compile_context>

<pallas_src>
import jax
import jax.numpy as jnp
from jax import lax
from jax.experimental import pallas as pl
from jax.experimental.pallas import tpu as pltpu


_INV_SQRT2 = 0.7071067811865476
_LANES = 128


def _cdiv(a, b):
    return -(-a // b)


def _round_up(n, m):
    return _cdiv(n, m) * m


def _wardmod_kernel(x_ref, w1_ref, b1_ref, w23_ref, b23_ref, o_ref):
    # x_ref: (tb, d_in) -- native batch-major tile straight from HBM.
    x = x_ref[...]

    # fc1 in feature-major form: h = W1 @ x^T -> (d_h, tb), batch on the 128 lanes.
    # Contracting x's dim 1 keeps this a standard A @ B^T MXU matmul.
    h = lax.dot_general(
        w1_ref[...], x,
        dimension_numbers=(((1,), (1,)), ((), ())),
        preferred_element_type=jnp.float32,
    ) + b1_ref[...]

    # Exact GELU (PyTorch approximate='none'), lane-dense in this layout.
    # TODO(synk): tanh-approx GELU would ride the EUP slot; kept exact per spec.
    h = 0.5 * h * (1.0 + lax.erf(h * jnp.float32(_INV_SQRT2)))

    # Fused fc2 + out: (d_out, d_h) @ (d_h, tb) + (d_out, 1) -> (d_out, tb).
    # Lane-dense output store.
    o_ref[...] = (
        jnp.dot(w23_ref[...], h, preferred_element_type=jnp.float32) + b23_ref[...]
    )


def prepare_params(params):
    """One-time weight prep (off the per-call hot path).

    Returns feature-major operands:
      w1  (d_h, d_in)  -- fc1 weight in native PyTorch (out,in) layout
      b1  (d_h, 1)
      w23 (d_out, d_h) -- out_w @ fc2_w   (fc2 and out algebraically fused)
      b23 (d_out, 1)   -- out_w @ fc2_b + out_b
    """
    w1 = params["fc1_w"].astype(jnp.float32)
    b1 = params["fc1_b"].astype(jnp.float32)[:, None]
    w23 = (params["out_w"] @ params["fc2_w"]).astype(jnp.float32)
    b23 = (params["out_w"] @ params["fc2_b"] + params["out_b"]).astype(jnp.float32)[:, None]
    return w1, b1, w23, b23


def _choose_batch_tile(batch, max_tile_b, split_threshold=1024):
    """Balanced batch tile.

    * batch <= split_threshold: a single exact tile (block dims == full array
      dims, so the (8,128) divisibility rule is satisfied trivially).
    * larger batches: near-equal multiple-of-128 tiles, capped at max_tile_b,
      with >= 2 grid steps so megacore / v7x's 2 TCs both get work, and no
      pathological padded tail (B=2100 -> 2 tiles of 1152/948, not 2048+pad).
    """
    if batch <= split_threshold:
        return batch
    n_steps = max(2, _cdiv(batch, max_tile_b))
    return min(_round_up(_cdiv(batch, n_steps), _LANES), max_tile_b)


def wardmod_forward(x, prepared, *, max_tile_b=8192, feature_major_out=False):
    """x: (B, d_in) float32. prepared: output of prepare_params().

    Returns (B, d_out) by default (PyTorch layout).  Pass feature_major_out=True
    to get the kernel's native (d_out, B) output and skip the final transpose.
    """
    w1, b1, w23, b23 = prepared
    batch, d_in = x.shape
    d_h = w1.shape[0]
    d_out = w23.shape[0]

    max_tile_b = _round_up(int(max_tile_b), _LANES)
    tb = _choose_batch_tile(batch, max_tile_b)
    grid = (_cdiv(batch, tb),)

    out_fm = pl.pallas_call(
        _wardmod_kernel,
        out_shape=jax.ShapeDtypeStruct((d_out, batch), jnp.float32),
        grid_spec=pltpu.PrefetchScalarGridSpec(
            num_scalar_prefetch=0,
            grid=grid,
            in_specs=[
                pl.BlockSpec((tb, d_in), lambda i: (i, 0)),    # x, native layout
                pl.BlockSpec((d_h, d_in), lambda i: (0, 0)),   # W1  (resident)
                pl.BlockSpec((d_h, 1), lambda i: (0, 0)),      # b1  (resident)
                pl.BlockSpec((d_out, d_h), lambda i: (0, 0)),  # W23 (resident)
                pl.BlockSpec((d_out, 1), lambda i: (0, 0)),    # b23 (resident)
            ],
            out_specs=pl.BlockSpec((d_out, tb), lambda i: (0, i)),
        ),
        compiler_params=pltpu.CompilerParams(
            dimension_semantics=("parallel",),  # batch axis: shard across TCs
        ),
    )(x, w1, b1, w23, b23)

    if feature_major_out:
        return out_fm          # (d_out, B) — no extra HBM pass
    return out_fm.T            # (B, d_out) — PyTorch return layout


def init_params(key, init_neurons=5, neuron_l1=16, neuron_l2=8, output=5):
    """Deterministic synthetic init (PyTorch-style uniform fan-in bounds)."""
    ks = jax.random.split(key, 6)

    def lin(kw, kb, fan_in, fan_out):
        bound = 1.0 / jnp.sqrt(jnp.float32(fan_in))
        w = jax.random.uniform(kw, (fan_out, fan_in), jnp.float32, -bound, bound)
        b = jax.random.uniform(kb, (fan_out,), jnp.float32, -bound, bound)
        return w, b

    fc1_w, fc1_b = lin(ks[0], ks[1], init_neurons, neuron_l1)
    fc2_w, fc2_b = lin(ks[2], ks[3], neuron_l1, neuron_l2)
    out_w, out_b = lin(ks[4], ks[5], neuron_l2, output)
    return {
        "fc1_w": fc1_w, "fc1_b": fc1_b,
        "fc2_w": fc2_w, "fc2_b": fc2_b,
        "out_w": out_w, "out_b": out_b,
    }


def wardmod_reference(x, params):
    """Pure-JAX layer-by-layer reference with PyTorch semantics."""
    h = x @ params["fc1_w"].T + params["fc1_b"]
    h = 0.5 * h * (1.0 + lax.erf(h * _INV_SQRT2))
    h = h @ params["fc2_w"].T + params["fc2_b"]
    return h @ params["out_w"].T + params["out_b"]


if __name__ == "__main__":
    key = jax.random.PRNGKey(0)
    k_x, k_x2, k_p = jax.random.split(key, 3)

    params = init_params(k_p)
    prepared = prepare_params(params)   # one-time weight fusion, off the hot path

    # Small shape consistent with the module (batch=8, features=5): one exact tile.
    x_small = jax.random.normal(k_x, (8, 5), jnp.float32)
    out_small = jax.block_until_ready(wardmod_forward(x_small, prepared))
    ref_small = wardmod_reference(x_small, params)
    assert out_small.shape == (8, 5)
    # Fused W2@W3 / feature-major accumulation changes fp32 rounding slightly.
    assert jnp.allclose(out_small, ref_small, atol=1e-4, rtol=1e-4), "mismatch (B=8)"

    # Multi-step grid with a ragged last tile (exercises the masked writeback
    # path and the >=2-step megacore split): batch=1300 -> 2 tiles of 768.
    x_big = jax.random.normal(k_x2, (1300, 5), jnp.float32)
    out_big = jax.block_until_ready(wardmod_forward(x_big, prepared))
    ref_big = wardmod_reference(x_big, params)
    assert out_big.shape == (1300, 5)
    assert jnp.allclose(out_big, ref_big, atol=1e-4, rtol=1e-4), "mismatch (B=1300)"

    print("KERNEL_OK")
</pallas_src>

<mosaic_0001>
module attributes {stable_mosaic.version = 11 : i64} {
  func.func @_wardmod_kernel(%arg0: i32, %arg1: memref<8x5xf32, #tpu.memory_space<vmem>>, %arg2: memref<16x5xf32, #tpu.memory_space<vmem>>, %arg3: memref<16x1xf32, #tpu.memory_space<vmem>>, %arg4: memref<5x16xf32, #tpu.memory_space<vmem>>, %arg5: memref<5x1xf32, #tpu.memory_space<vmem>>, %arg6: memref<5x8xf32, #tpu.memory_space<vmem>>) attributes {dimension_semantics = [#tpu.dimension_semantics<parallel>], iteration_bounds = array<i64: 1>, scalar_prefetch = 0 : i64, scratch_operands = 0 : i64, tpu.core_type = #tpu.core_type<tc>, window_params = [{transform_indices = @transform_0, window_bounds = array<i64: 8, 5>}, {pipeline_mode = #tpu.pipeline_mode<synchronous>, transform_indices = @transform_1, window_bounds = array<i64: 16, 5>}, {pipeline_mode = #tpu.pipeline_mode<synchronous>, transform_indices = @transform_2, window_bounds = array<i64: 16, 1>}, {pipeline_mode = #tpu.pipeline_mode<synchronous>, transform_indices = @transform_3, window_bounds = array<i64: 5, 16>}, {pipeline_mode = #tpu.pipeline_mode<synchronous>, transform_indices = @transform_4, window_bounds = array<i64: 5, 1>}, {transform_indices = @transform_5, window_bounds = array<i64: 5, 8>}]} {
    %c0 = arith.constant 0 : index
    %c0_0 = arith.constant 0 : index
    %0 = vector.load %arg1[%c0, %c0_0] : memref<8x5xf32, #tpu.memory_space<vmem>>, vector<8x5xf32>
    %c0_1 = arith.constant 0 : index
    %c0_2 = arith.constant 0 : index
    %1 = vector.load %arg2[%c0_1, %c0_2] : memref<16x5xf32, #tpu.memory_space<vmem>>, vector<16x5xf32>
    %cst = arith.constant dense<0.000000e+00> : vector<16x8xf32>
    %2 = tpu.matmul %1, %0, %cst {dimension_numbers = #tpu.dot_dimension_numbers<[1], [1], [0], [0], [0, 0, 1, 0], [], []>} : vector<16x5xf32>, vector<8x5xf32>, vector<16x8xf32> -> vector<16x8xf32>
    %c0_3 = arith.constant 0 : index
    %c0_4 = arith.constant 0 : index
    %3 = vector.load %arg3[%c0_3, %c0_4] : memref<16x1xf32, #tpu.memory_space<vmem>>, vector<16x1xf32>
    %4 = vector.broadcast %3 : vector<16x1xf32> to vector<16x8xf32>
    %5 = arith.addf %2, %4 : vector<16x8xf32>
    %cst_5 = arith.constant 5.000000e-01 : f32
    %6 = vector.broadcast %cst_5 : f32 to vector<16x8xf32>
    %7 = arith.mulf %6, %5 : vector<16x8xf32>
    %cst_6 = arith.constant 0.707106769 : f32
    %8 = vector.broadcast %cst_6 : f32 to vector<16x8xf32>
    %9 = arith.mulf %5, %8 : vector<16x8xf32>
    %10 = math.erf %9 : vector<16x8xf32>
    %cst_7 = arith.constant 1.000000e+00 : f32
    %11 = vector.broadcast %cst_7 : f32 to vector<16x8xf32>
    %12 = arith.addf %11, %10 : vector<16x8xf32>
    %13 = arith.mulf %7, %12 : vector<16x8xf32>
    %c0_8 = arith.constant 0 : index
    %c0_9 = arith.constant 0 : index
    %14 = vector.load %arg4[%c0_8, %c0_9] : memref<5x16xf32, #tpu.memory_space<vmem>>, vector<5x16xf32>
    %cst_10 = arith.constant dense<0.000000e+00> : vector<5x8xf32>
    %15 = tpu.matmul %14, %13, %cst_10 {dimension_numbers = #tpu.dot_dimension_numbers<[1], [0], [0], [1], [0, 0, 1, 1], [], []>} : vector<5x16xf32>, vector<16x8xf32>, vector<5x8xf32> -> vector<5x8xf32>
    %c0_11 = arith.constant 0 : index
    %c0_12 = arith.constant 0 : index
    %16 = vector.load %arg5[%c0_11, %c0_12] : memref<5x1xf32, #tpu.memory_space<vmem>>, vector<5x1xf32>
    %17 = vector.broadcast %16 : vector<5x1xf32> to vector<5x8xf32>
    %18 = arith.addf %15, %17 : vector<5x8xf32>
    %c0_13 = arith.constant 0 : index
    %c0_14 = arith.constant 0 : index
    %19 = vector.load %arg6[%c0_13, %c0_14] : memref<5x8xf32, #tpu.memory_space<vmem>>, vector<5x8xf32>
    tpu.vector_store %arg6[%c0_13, %c0_14], %18 {strides = array<i32>} : memref<5x8xf32, #tpu.memory_space<vmem>>, vector<5x8xf32>,
    return
  }
  func.func @transform_0(%arg0: i32) -> (i32, i32) {
    %c0_i32 = arith.constant 0 : i32
    %c0_i32_0 = arith.constant 0 : i32
    return %arg0, %c0_i32 : i32, i32
  }
  func.func @transform_1(%arg0: i32) -> (i32, i32) {
    %c0_i32 = arith.constant 0 : i32
    %c0_i32_0 = arith.constant 0 : i32
    %c0_i32_1 = arith.constant 0 : i32
    return %c0_i32, %c0_i32_0 : i32, i32
  }
  func.func @transform_2(%arg0: i32) -> (i32, i32) {
    %c0_i32 = arith.constant 0 : i32
    %c0_i32_0 = arith.constant 0 : i32
    %c0_i32_1 = arith.constant 0 : i32
    return %c0_i32, %c0_i32_0 : i32, i32
  }
  func.func @transform_3(%arg0: i32) -> (i32, i32) {
    %c0_i32 = arith.constant 0 : i32
    %c0_i32_0 = arith.constant 0 : i32
    %c0_i32_1 = arith.constant 0 : i32
    return %c0_i32, %c0_i32_0 : i32, i32
  }
  func.func @transform_4(%arg0: i32) -> (i32, i32) {
    %c0_i32 = arith.constant 0 : i32
    %c0_i32_0 = arith.constant 0 : i32
    %c0_i32_1 = arith.constant 0 : i32
    return %c0_i32, %c0_i32_0 : i32, i32
  }
  func.func @transform_5(%arg0: i32) -> (i32, i32) {
    %c0_i32 = arith.constant 0 : i32
    %c0_i32_0 = arith.constant 0 : i32
    return %c0_i32, %arg0 : i32, i32
  }
}

</mosaic_0001>

<llo_original>
// kernel: tpu_custom_call.1
$region0: #{tpu_custom_call.1}
  #allocation0 [shape = 'u32[]', space=smem, size = 0x4, offset = 0x4, fixed_abs, tag = 'smem constant byte address 0x4 - core index']
  #allocation1 [shape = 'u32[144,128]{1,0:T(1,128)}', space=vmem, size = 0x12000, scoped, tag = 'internal scratch']
  %s0 = inlined_call_operand.vmem [shape: f32[8,5], index: 0, kind: input, shape index: {}]
  %s1 = inlined_call_operand.vmem [shape: f32[16,5], index: 1, kind: input, shape index: {}]
  %s2 = inlined_call_operand.vmem [shape: f32[16,1], index: 2, kind: input, shape index: {}]
  %s3 = inlined_call_operand.vmem [shape: f32[5,16], index: 3, kind: input, shape index: {}]
  %s4 = inlined_call_operand.vmem [shape: f32[5,1], index: 4, kind: input, shape index: {}]
  %s5 = inlined_call_operand.hbm [shape: f32[5,8], index: 5, kind: output, shape index: {}]
  %s6 = sld [smem:[#allocation0]]
  $region30: #{tpu_custom_call.1} parent=0
    _
  %s8 = ssub.s32 1, %s6
  %s9 = scalar_select 0, %s8, %s6
  $region1: #{tpu_custom_call.1} parent=0
    #allocation2 [shape = 'u8[4096]{0}', space=vmem, size = 0x1000, scoped, tag = 'output window, operand 0, single buffered']
    #allocation3 [shape = 's32[1]{0}', space=sflag, size = 0x4, scoped, tag = 'scoped memory for tpu_custom_call.1']
    %10 = vsyncpa [#allocation3], 0
    // Predicated region
    $region2: #{tpu_custom_call.1} parent=1 // pred_check
      _
    $region3: #{tpu_custom_call.1} parent=1 // pred_check_branch
      %12 = sbr.rel (0) target = $region5
    $region4: #{tpu_custom_call.1} parent=1 // pred_region
      _
    $region5: #{tpu_custom_call.1} parent=1 // pred_fallthru
      _
    // Predicated region
    $region6: #{tpu_custom_call.1} parent=1 // pred_check
      _
    $region7: #{tpu_custom_call.1} parent=1 // pred_check_branch
      %14 = sbr.rel (0) target = $region9
    $region8: #{tpu_custom_call.1} parent=1 // pred_region
      _
    $region9: #{tpu_custom_call.1} parent=1 // pred_fallthru
      _
    // Predicated region
    $region10: #{tpu_custom_call.1} parent=1 // pred_check
      _
    $region11: #{tpu_custom_call.1} parent=1 // pred_check_branch
      %16 = sbr.rel (0) target = $region13
    $region12: #{tpu_custom_call.1} parent=1 // pred_region
      _
    $region13: #{tpu_custom_call.1} parent=1 // pred_fallthru
      _
    // Predicated region
    $region14: #{tpu_custom_call.1} parent=1 // pred_check
      _
    $region15: #{tpu_custom_call.1} parent=1 // pred_check_branch
      %18 = sbr.rel (0) target = $region17
    $region16: #{tpu_custom_call.1} parent=1 // pred_region
      _
    $region17: #{tpu_custom_call.1} parent=1 // pred_fallthru
      _
    // Predicated region
    $region18: #{tpu_custom_call.1} parent=1 // pred_check
      _
    $region19: #{tpu_custom_call.1} parent=1 // pred_check_branch
      %20 = sbr.rel (0) target = $region21
    $region20: #{tpu_custom_call.1} parent=1 // pred_region
      _
    $region21: #{tpu_custom_call.1} parent=1 // pred_fallthru
      _
    %v21 = vld [vmem:[%s0] sm:$0xff]
    %v22 = vld [vmem:[%s1] sm:$0xff]
    %v23 = vld [vmem:[%s1 + $0x8] sm:$0xff]
    %v24 = vld [vmem:[%s2] sm:$0xff]
    %v25 = vld [vmem:[%s2 + $0x8] sm:$0xff]
    %27 = vset.pattern.permute.xlu0 0
    %28 = vperm.xlu0 %27, %v24
    %v29 = vpop.permute.xlu0 %28
    %32 = vset.pattern.permute.xlu0 0
    %33 = vperm.xlu0 %32, %v25
    %v34 = vpop.permute.xlu0 %33
    %vm36 = vcmask 39936
    %v38 = vsel %vm36, %v22, 0
    %v41 = vsel %vm36, %v23, 0
    %v44 = vsel %vm36, %v21, 0
    %46 = vmatprep.subr.mxu0 0.0
    %47 = vmatpush1.xpose.msra.mxu0 0.0
    %48 = vmatprep.subr.mxu0 0.0
    %49 = vmatpush1.xpose.msra.mxu0 0.0
    %50 = vmatprep.subr.mxu0 0.0
    %51 = vmatpush1.xpose.msra.mxu0 0.0
    %52 = vmatprep.subr.mxu0 0.0
    %53 = vmatpush1.xpose.msra.mxu0 0.0
    %54 = vmatprep.subr.mxu0 0.0
    %55 = vmatpush1.xpose.msra.mxu0 0.0
    %56 = vmatprep.subr.mxu0 0.0
    %57 = vmatpush1.xpose.msra.mxu0 0.0
    %58 = vmatprep.subr.mxu0 0.0
    %59 = vmatpush1.xpose.msra.mxu0 0.0
    %60 = vmatprep.subr.mxu0 0.0
    %61 = vmatpush1.xpose.msra.mxu0 0.0
    %62 = vmatprep.subr.mxu0 0.0
    %63 = vmatpush1.xpose.msra.mxu0 0.0
    %64 = vmatprep.subr.mxu0 0.0
    %65 = vmatpush1.xpose.msra.mxu0 0.0
    %66 = vmatprep.subr.mxu0 0.0
    %67 = vmatpush1.xpose.msra.mxu0 0.0
    %68 = vmatprep.subr.mxu0 0.0
    %69 = vmatpush1.xpose.msra.mxu0 0.0
    %70 = vmatprep.subr.mxu0 0.0
    %71 = vmatpush1.xpose.msra.mxu0 0.0
    %72 = vmatprep.subr.mxu0 0.0
    %73 = vmatpush1.xpose.msra.mxu0 0.0
    %74 = vmatprep.subr.mxu0 0.0
    %75 = vmatpush1.xpose.msra.mxu0 0.0
    %76 = vmatprep.subr.mxu0 0.0
    %77 = vmatpush1.xpose.msra.mxu0 %v44
    %78 = vmatprep.subr.mxu0 0.0
    %79 = vmatpush2.xpose.msra.mxu0 0.0
    %80 = vmatprep.subr.mxu0 0.0
    %81 = vmatpush2.xpose.msra.mxu0 0.0
    %82 = vmatprep.subr.mxu0 0.0
    %83 = vmatpush2.xpose.msra.mxu0 0.0
    %84 = vmatprep.subr.mxu0 0.0
    %85 = vmatpush2.xpose.msra.mxu0 0.0
    %86 = vmatprep.subr.mxu0 0.0
    %87 = vmatpush2.xpose.msra.mxu0 0.0
    %88 = vmatprep.subr.mxu0 0.0
    %89 = vmatpush2.xpose.msra.mxu0 0.0
    %90 = vmatprep.subr.mxu0 0.0
    %91 = vmatpush2.xpose.msra.mxu0 0.0
    %92 = vmatprep.subr.mxu0 0.0
    %93 = vmatpush2.xpose.msra.mxu0 0.0
    %94 = vmatprep.subr.mxu0 0.0
    %95 = vmatpush2.xpose.msra.mxu0 0.0
    %96 = vmatprep.subr.mxu0 0.0
    %97 = vmatpush2.xpose.msra.mxu0 0.0
    %98 = vmatprep.subr.mxu0 0.0
    %99 = vmatpush2.xpose.msra.mxu0 0.0
    %100 = vmatprep.subr.mxu0 0.0
    %101 = vmatpush2.xpose.msra.mxu0 0.0
    %102 = vmatprep.subr.mxu0 0.0
    %103 = vmatpush2.xpose.msra.mxu0 0.0
    %104 = vmatprep.subr.mxu0 0.0
    %105 = vmatpush2.xpose.msra.mxu0 0.0
    %106 = vmatprep.subr.mxu0 0.0
    %107 = vmatpush2.xpose.msra.mxu0 0.0
    %108 = vmatprep.subr.mxu0 0.0
    %109 = vmatpush2.xpose.msra.mxu0 0.0
    %110 = vmatprep.mubr.f32.mxu0 0.0
    %111 = vmatmul.mubr.f32.gmra.mxu0 %v38
    %v112 = vpop.f32.mrf.mxu0
    %v113 = vadd.f32 %v29, %v112
    %v114 = vpop.f32.mrf.mxu0
    %115 = vmatprep.mubr.f32.mxu0 0.0
    %116 = vmatmul.mubr.f32.gmra.mxu0 %v41
    %v117 = vpop.f32.mrf.mxu0
    %v118 = vadd.f32 %v34, %v117
    %v119 = vpop.f32.mrf.mxu0
    %120 = vdwg.mxu0
    %v121 = vmul.f32 %v113, 0.5
    %v122 = vmul.f32 %v118, 0.5
    %v123 = vmul.f32 %v113, 0.70710677
    %v124 = vmul.f32 %v118, 0.70710677
    %v125 = verf.f32.pop %v123
    %v126 = verf.f32.pop %v124
    %v127 = vadd.f32 %v125, 1.0
    %v128 = vadd.f32 %v126, 1.0
    %v129 = vmul.f32 %v121, %v127
    %v130 = vmul.f32 %v122, %v128
    %v131 = vld [vmem:[%s3] sm:$0x1f]
    %v132 = vld [vmem:[%s4] sm:$0x1f]
    %134 = vset.pattern.permute.xlu0 0
    %135 = vperm.xlu0 %134, %v132
    %v136 = vpop.permute.xlu0 %135
    %vm138 = vcmask 130048
    %v140 = vsel %vm138, %v131, 0
    %142 = vmatprep.subr.mxu0 0.0
    %143 = vmatpush1.msra.mxu0 0.0
    %144 = vmatprep.subr.mxu0 0.0
    %145 = vmatpush1.msra.mxu0 0.0
    %146 = vmatprep.subr.mxu0 0.0
    %147 = vmatpush1.msra.mxu0 0.0
    %148 = vmatprep.subr.mxu0 0.0
    %149 = vmatpush1.msra.mxu0 0.0
    %150 = vmatprep.subr.mxu0 0.0
    %151 = vmatpush1.msra.mxu0 0.0
    %152 = vmatprep.subr.mxu0 0.0
    %153 = vmatpush1.msra.mxu0 0.0
    %154 = vmatprep.subr.mxu0 0.0
    %155 = vmatpush1.msra.mxu0 0.0
    %156 = vmatprep.subr.mxu0 0.0
    %157 = vmatpush1.msra.mxu0 0.0
    %158 = vmatprep.subr.mxu0 0.0
    %159 = vmatpush1.msra.mxu0 0.0
    %160 = vmatprep.subr.mxu0 0.0
    %161 = vmatpush1.msra.mxu0 0.0
    %162 = vmatprep.subr.mxu0 0.0
    %163 = vmatpush1.msra.mxu0 0.0
    %164 = vmatprep.subr.mxu0 0.0
    %165 = vmatpush1.msra.mxu0 0.0
    %166 = vmatprep.subr.mxu0 0.0
    %167 = vmatpush1.msra.mxu0 0.0
    %168 = vmatprep.subr.mxu0 0.0
    %169 = vmatpush1.msra.mxu0 0.0
    %170 = vmatprep.subr.mxu0 0.0
    %171 = vmatpush1.msra.mxu0 %v130
    %172 = vmatprep.subr.mxu0 0.0
    %173 = vmatpush1.msra.mxu0 %v129
    %174 = vmatprep.subr.mxu0 0.0
    %175 = vmatpush2.msra.mxu0 0.0
    %176 = vmatprep.subr.mxu0 0.0
    %177 = vmatpush2.msra.mxu0 0.0
    %178 = vmatprep.subr.mxu0 0.0
    %179 = vmatpush2.msra.mxu0 0.0
    %180 = vmatprep.subr.mxu0 0.0
    %181 = vmatpush2.msra.mxu0 0.0
    %182 = vmatprep.subr.mxu0 0.0
    %183 = vmatpush2.msra.mxu0 0.0
    %184 = vmatprep.subr.mxu0 0.0
    %185 = vmatpush2.msra.mxu0 0.0
    %186 = vmatprep.subr.mxu0 0.0
    %187 = vmatpush2.msra.mxu0 0.0
    %188 = vmatprep.subr.mxu0 0.0
    %189 = vmatpush2.msra.mxu0 0.0
    %190 = vmatprep.subr.mxu0 0.0
    %191 = vmatpush2.msra.mxu0 0.0
    %192 = vmatprep.subr.mxu0 0.0
    %193 = vmatpush2.msra.mxu0 0.0
    %194 = vmatprep.subr.mxu0 0.0
    %195 = vmatpush2.msra.mxu0 0.0
    %196 = vmatprep.subr.mxu0 0.0
    %197 = vmatpush2.msra.mxu0 0.0
    %198 = vmatprep.subr.mxu0 0.0
    %199 = vmatpush2.msra.mxu0 0.0
    %200 = vmatprep.subr.mxu0 0.0
    %201 = vmatpush2.msra.mxu0 0.0
    %202 = vmatprep.subr.mxu0 0.0
    %203 = vmatpush2.msra.mxu0 0.0
    %204 = vmatprep.subr.mxu0 0.0
    %205 = vmatpush2.msra.mxu0 0.0
    %206 = vmatprep.mubr.f32.mxu0 0.0
    %207 = vmatmul.mubr.f32.gmra.mxu0 %v140
    %v208 = vpop.f32.mrf.mxu0
    %v209 = vadd.f32 %v136, %v208
    %v210 = vpop.f32.mrf.mxu0
    %211 = vdwg.mxu0
    %vm212 = vcmask 61440
    %213 = vst.msk [vmem:[#allocation2] sm:$0x1f] %vm212, %v209
    // Predicated region
    $region22: #{tpu_custom_call.1} parent=1 // pred_check
      _
    $region23: #{tpu_custom_call.1} parent=1 // pred_check_branch
      %215 = sbr.rel (0) target = $region25
    $region24: #{tpu_custom_call.1} parent=1 // pred_region
      %s217 = ssub.s32 128, 128
      %218 = vsyncadd [#allocation3], %s217
      %s220 = sshll.u32 [#allocation2], 4
      %s221 = int_to_ptr.vmem [resolvable:$true] %s220
      %223 = dma.vmem_to_hbm [thread:$0]  %s221, 128, %s5, [#allocation3]
    $region25: #{tpu_custom_call.1} parent=1 // pred_fallthru
      _
    // Predicated region
    $region26: #{tpu_custom_call.1} parent=1 // pred_check
      _
    $region27: #{tpu_custom_call.1} parent=1 // pred_check_branch
      %225 = sbr.rel (0) target = $region29
    $region28: #{tpu_custom_call.1} parent=1 // pred_region
      %226 = dma.done [#allocation3], 128
    $region29: #{tpu_custom_call.1} parent=1 // pred_fallthru
      _
    %227 = vsyncpa [#allocation3], 1

</llo_original>
